<compile_context>
chip_gen: v5e
topology: v5e:2x2
jax: 0.10.0
libtpu: 0.0.40
codegen_flags: <defaults>
</compile_context>

<pallas_src>
import functools
import math

import jax
import jax.numpy as jnp
from jax.experimental import pallas as pl
from jax.experimental.pallas import tpu as pltpu


_NEG = -1e9


def _round_up(x, m):
    return (x + m - 1) // m * m


@functools.lru_cache(maxsize=None)
def _vmem_limit_bytes():
    """Generation-aware scoped-VMEM limit (~75% of physical, capped at 96 MiB)."""
    try:
        cap = int(pltpu.get_tpu_info().vmem_capacity_bytes)
    except Exception:
        cap = 64 * 1024 * 1024
    return max(32 * 1024 * 1024, min(cap * 3 // 4, 96 * 1024 * 1024))


@functools.lru_cache(maxsize=None)
def _default_tiles():
    """Bigger N tiles on v5e/v6e (128 MiB VMEM); conservative on v7x (64 MiB)."""
    big = _vmem_limit_bytes() >= 64 * 1024 * 1024
    return 512, (1024 if big else 512), 512        # (tm, tn, tk)


def _pick_feat_tile(dim, pref):
    """Tile for a feature (lane) axis: full dim if it fits, else a 128-multiple
    dividing round_up(dim, 128) so pre-aligned weights never need a per-call pad."""
    if dim <= pref:
        return dim, dim
    dp = _round_up(dim, 128)
    t = max(128, pref - pref % 128)
    t = min(t, dp)
    while dp % t:
        t -= 128
    return t, dp


# ----------------------------- tiled linear --------------------------------

def _linear_kernel(x_ref, w_ref, b_ref, o_ref, acc_ref, *, activation):
    @pl.when(pl.program_id(2) == 0)
    def _():
        acc_ref[...] = jnp.zeros_like(acc_ref)

    acc_ref[...] += jnp.dot(x_ref[...], w_ref[...],
                            preferred_element_type=jnp.float32)

    @pl.when(pl.program_id(2) == pl.num_programs(2) - 1)
    def _():
        y = acc_ref[...] + b_ref[...]
        if activation == "relu":
            y = jnp.maximum(y, 0.0)
        o_ref[...] = y.astype(o_ref.dtype)


def pallas_linear(x2d, w, b, activation=None, out_dtype=jnp.bfloat16,
                  tm=None, tn=None, tk=None):
    """y = act(x @ w + b); w is (in, out) == PyTorch weight.T, stored bf16."""
    dm, dn, dk = _default_tiles()
    tm = tm or dm
    tn = tn or dn
    tk = tk or dk

    M, K = x2d.shape
    N = w.shape[1]
    tm = min(tm, _round_up(M, 8))
    Mp = _round_up(M, tm)
    tk, Kp = _pick_feat_tile(K, tk)
    tn, Np = _pick_feat_tile(N, tn)

    x = x2d.astype(jnp.bfloat16)
    if Mp != M or Kp != K:
        x = jnp.pad(x, ((0, Mp - M), (0, Kp - K)))
    wp = w.astype(jnp.bfloat16)
    if wp.shape != (Kp, Np):                 # only hit if a weight was not pre-aligned
        wp = jnp.pad(wp, ((0, Kp - K), (0, Np - N)))
    bp = b.astype(jnp.float32)
    if bp.shape[0] != Np:
        bp = jnp.pad(bp, (0, Np - N))
    bp = bp.reshape(1, Np)

    out = pl.pallas_call(
        functools.partial(_linear_kernel, activation=activation),
        out_shape=jax.ShapeDtypeStruct((Mp, Np), out_dtype),
        grid=(Mp // tm, Np // tn, Kp // tk),
        in_specs=[
            pl.BlockSpec((tm, tk), lambda i, j, k: (i, k)),
            pl.BlockSpec((tk, tn), lambda i, j, k: (k, j)),
            pl.BlockSpec((1, tn), lambda i, j, k: (0, j)),
        ],
        out_specs=pl.BlockSpec((tm, tn), lambda i, j, k: (i, j)),
        scratch_shapes=[pltpu.VMEM((tm, tn), jnp.float32)],
        compiler_params=pltpu.CompilerParams(
            dimension_semantics=("parallel", "parallel", "arbitrary"),
            vmem_limit_bytes=_vmem_limit_bytes(),
        ),
    )(x, wp, bp)

    if Mp != M or Np != N:
        out = out[:M, :N]
    return out


# ----------------------------- flash attention ------------------------------

def _flash_kernel(q_ref, k_ref, v_ref, bias_ref, o_ref, m_sc, l_sc, acc_sc,
                  *, causal, tq, tk):
    ki = pl.program_id(2)

    @pl.when(ki == 0)
    def _():
        m_sc[...] = jnp.full_like(m_sc, -jnp.inf)
        l_sc[...] = jnp.zeros_like(l_sc)
        acc_sc[...] = jnp.zeros_like(acc_sc)

    q = q_ref[0]                                              # (tq, Dh) bf16, pre-scaled
    k = k_ref[0]                                              # (tk, Dh) bf16
    s = jnp.dot(q, k.T, preferred_element_type=jnp.float32)   # (tq, tk) f32
    s = s + bias_ref[0]                                       # key-padding bias (1, tk)
    if causal:
        qi = pl.program_id(1)
        row = qi * tq + jax.lax.broadcasted_iota(jnp.int32, (tq, tk), 0)
        col = ki * tk + jax.lax.broadcasted_iota(jnp.int32, (tq, tk), 1)
        s = s + jnp.where(col > row, _NEG, 0.0)

    m_prev = m_sc[...]
    m_new = jnp.maximum(m_prev, s.max(axis=-1, keepdims=True))
    alpha = jnp.exp(m_prev - m_new)
    p = jnp.exp(s - m_new)
    l_sc[...] = alpha * l_sc[...] + p.sum(axis=-1, keepdims=True)
    acc_sc[...] = alpha * acc_sc[...] + jnp.dot(
        p.astype(jnp.bfloat16), v_ref[0], preferred_element_type=jnp.float32)
    m_sc[...] = m_new

    @pl.when(ki == pl.num_programs(2) - 1)
    def _():
        inv = pl.reciprocal(l_sc[...], approx=True)
        o_ref[0] = (acc_sc[...] * inv).astype(o_ref.dtype)


def pallas_flash_attention(q, k, v, bias, nhead, causal, tq=256, tk=256):
    """q:(B*H,T,Dh), k/v:(B*H,S,Dh) bf16; bias:(B,1,S) f32 additive key-padding bias."""
    BH, T, Dh = q.shape
    S = k.shape[1]
    tq = min(tq, _round_up(T, 8))
    Tp = _round_up(T, tq)
    tk = min(tk, _round_up(S, 8))
    Sp = _round_up(S, tk)
    if Tp != T:
        q = jnp.pad(q, ((0, 0), (0, Tp - T), (0, 0)))
    if Sp != S:
        k = jnp.pad(k, ((0, 0), (0, Sp - S), (0, 0)))
        v = jnp.pad(v, ((0, 0), (0, Sp - S), (0, 0)))
        bias = jnp.pad(bias, ((0, 0), (0, 0), (0, Sp - S)), constant_values=_NEG)

    out = pl.pallas_call(
        functools.partial(_flash_kernel, causal=causal, tq=tq, tk=tk),
        out_shape=jax.ShapeDtypeStruct((BH, Tp, Dh), jnp.bfloat16),
        grid=(BH, Tp // tq, Sp // tk),
        in_specs=[
            pl.BlockSpec((1, tq, Dh), lambda b, i, j: (b, i, 0)),
            pl.BlockSpec((1, tk, Dh), lambda b, i, j: (b, j, 0)),
            pl.BlockSpec((1, tk, Dh), lambda b, i, j: (b, j, 0)),
            pl.BlockSpec((1, 1, tk), lambda b, i, j: (b // nhead, 0, j)),
        ],
        out_specs=pl.BlockSpec((1, tq, Dh), lambda b, i, j: (b, i, 0)),
        scratch_shapes=[
            pltpu.VMEM((tq, 1), jnp.float32),     # running max
            pltpu.VMEM((tq, 1), jnp.float32),     # running denom
            pltpu.VMEM((tq, Dh), jnp.float32),    # accumulator
        ],
        compiler_params=pltpu.CompilerParams(
            dimension_semantics=("parallel", "parallel", "arbitrary"),
            vmem_limit_bytes=_vmem_limit_bytes(),
        ),
    )(q, k, v, bias)
    return out[:, :T, :] if Tp != T else out


# ----------------------------- fused residual + LayerNorm ------------------

def _ln_math(x, g, b, eps):
    mu = jnp.mean(x, axis=-1, keepdims=True)
    msq = jnp.mean(x * x, axis=-1, keepdims=True)
    var = msq - mu * mu
    return (x - mu) * jax.lax.rsqrt(var + eps) * g + b


def _ln_kernel(x_ref, g_ref, b_ref, o_ref, *, eps):
    x = x_ref[...].astype(jnp.float32)
    o_ref[...] = _ln_math(x, g_ref[...], b_ref[...], eps).astype(o_ref.dtype)


def _add_ln_kernel(x_ref, r_ref, g_ref, b_ref, o_ref, *, eps):
    x = x_ref[...].astype(jnp.float32) + r_ref[...].astype(jnp.float32)
    o_ref[...] = _ln_math(x, g_ref[...], b_ref[...], eps).astype(o_ref.dtype)


def pallas_layernorm(x2d, gamma, beta, residual=None, eps=1e-5, tm=512):
    M, D = x2d.shape
    tm = min(tm, _round_up(M, 8))
    Mp = _round_up(M, tm)

    def prep(a):
        a = a.astype(jnp.bfloat16)
        return a if Mp == M else jnp.pad(a, ((0, Mp - M), (0, 0)))

    row_spec = pl.BlockSpec((tm, D), lambda i: (i, 0))
    vec_spec = pl.BlockSpec((1, D), lambda i: (0, 0))
    g2 = gamma.astype(jnp.float32).reshape(1, D)
    b2 = beta.astype(jnp.float32).reshape(1, D)

    if residual is None:
        kern = functools.partial(_ln_kernel, eps=eps)
        in_specs = [row_spec, vec_spec, vec_spec]
        args = (prep(x2d), g2, b2)
    else:
        kern = functools.partial(_add_ln_kernel, eps=eps)
        in_specs = [row_spec, row_spec, vec_spec, vec_spec]
        args = (prep(x2d), prep(residual), g2, b2)

    out = pl.pallas_call(
        kern,
        out_shape=jax.ShapeDtypeStruct((Mp, D), jnp.bfloat16),
        grid=(Mp // tm,),
        in_specs=in_specs,
        out_specs=row_spec,
        compiler_params=pltpu.CompilerParams(
            dimension_semantics=("parallel",),
            vmem_limit_bytes=_vmem_limit_bytes(),
        ),
    )(*args)
    return out if Mp == M else out[:M]


# ----------------------------- model composition ---------------------------

def multi_head_attention_self(x, p, nhead, kp_bias, causal):
    B, L, d = x.shape
    Dh = d // nhead
    qkv = pallas_linear(x.reshape(B * L, d), p["in_w"], p["in_b"])       # (B*L, 3d)
    qkv = qkv.reshape(B, L, 3, nhead, Dh).transpose(2, 0, 3, 1, 4)       # (3,B,H,L,Dh)
    q = qkv[0].reshape(B * nhead, L, Dh)
    k = qkv[1].reshape(B * nhead, L, Dh)
    v = qkv[2].reshape(B * nhead, L, Dh)
    o = pallas_flash_attention(q, k, v, kp_bias, nhead, causal)
    o = o.reshape(B, nhead, L, Dh).transpose(0, 2, 1, 3).reshape(B * L, d)
    out = pallas_linear(o, p["out_w"], p["out_b"])
    return out.reshape(B, L, d)


def multi_head_attention_cross(x, memory, p, nhead, kp_bias):
    B, T, d = x.shape
    S = memory.shape[1]
    Dh = d // nhead
    q = pallas_linear(x.reshape(B * T, d), p["q_w"], p["q_b"])
    q = q.reshape(B, T, nhead, Dh).transpose(0, 2, 1, 3).reshape(B * nhead, T, Dh)
    kv = pallas_linear(memory.reshape(B * S, d), p["kv_w"], p["kv_b"])
    kv = kv.reshape(B, S, 2, nhead, Dh).transpose(2, 0, 3, 1, 4)
    k = kv[0].reshape(B * nhead, S, Dh)
    v = kv[1].reshape(B * nhead, S, Dh)
    o = pallas_flash_attention(q, k, v, kp_bias, nhead, causal=False)
    o = o.reshape(B, nhead, T, Dh).transpose(0, 2, 1, 3).reshape(B * T, d)
    out = pallas_linear(o, p["out_w"], p["out_b"])
    return out.reshape(B, T, d)


def feed_forward(x, p):
    B, L, d = x.shape
    h = pallas_linear(x.reshape(B * L, d), p["w1"], p["b1"], activation="relu")
    h = pallas_linear(h, p["w2"], p["b2"])
    return h.reshape(B, L, d)


def add_layer_norm(x, delta, p):
    B, L, d = x.shape
    return pallas_layernorm(x.reshape(B * L, d), p["g"], p["b"],
                            residual=delta.reshape(B * L, d)).reshape(B, L, d)


def final_layer_norm(x, p):
    B, L, d = x.shape
    return pallas_layernorm(x.reshape(B * L, d), p["g"], p["b"]).reshape(B, L, d)


def encoder_layer(x, p, nhead, src_bias):
    sa = multi_head_attention_self(x, p["self_attn"], nhead, src_bias, causal=False)
    x = add_layer_norm(x, sa, p["norm1"])
    ff = feed_forward(x, p["ffn"])
    x = add_layer_norm(x, ff, p["norm2"])
    return x


def decoder_layer(y, memory, p, nhead, tgt_bias, mem_bias):
    sa = multi_head_attention_self(y, p["self_attn"], nhead, tgt_bias, causal=True)
    y = add_layer_norm(y, sa, p["norm1"])
    # memory_key_padding_mask is None in the PyTorch module's transformer call
    ca = multi_head_attention_cross(y, memory, p["cross_attn"], nhead, mem_bias)
    y = add_layer_norm(y, ca, p["norm2"])
    ff = feed_forward(y, p["ffn"])
    y = add_layer_norm(y, ff, p["norm3"])
    return y


def positional_encoding(length, d_model):
    pos = jnp.arange(length, dtype=jnp.float32)[:, None]
    div = jnp.exp(jnp.arange(0, d_model, 2, dtype=jnp.float32)
                  * (-math.log(10000.0) / d_model))
    pe = jnp.zeros((length, d_model), jnp.float32)
    pe = pe.at[:, 0::2].set(jnp.sin(pos * div))
    pe = pe.at[:, 1::2].set(jnp.cos(pos * div))
    return pe


def code_transformer_forward(params, src, tgt, pad_id):
    d_model = params["d_model"]
    nhead = params["nhead"]
    vocab = params["vocab_size"]
    B, S = src.shape
    T = tgt.shape[1]

    # tiny additive key-padding biases; causal mask is built inside the kernel
    src_bias = jnp.where(src == pad_id, _NEG, 0.0).astype(jnp.float32).reshape(B, 1, S)
    tgt_bias = jnp.where(tgt == pad_id, _NEG, 0.0).astype(jnp.float32).reshape(B, 1, T)
    mem_bias = jnp.zeros((B, 1, S), jnp.float32)

    # embedding lookup (gather is XLA glue) * sqrt(d_model) + positional encoding
    emb = params["embedding"]
    src_emb = jnp.take(emb, src, axis=0).astype(jnp.float32) * math.sqrt(d_model)
    tgt_emb = jnp.take(emb, tgt, axis=0).astype(jnp.float32) * math.sqrt(d_model)
    src_emb = (src_emb + positional_encoding(S, d_model)[None]).astype(jnp.bfloat16)
    tgt_emb = (tgt_emb + positional_encoding(T, d_model)[None]).astype(jnp.bfloat16)

    # encoder stack
    x = src_emb
    for lp in params["enc_layers"]:
        x = encoder_layer(x, lp, nhead, src_bias)
    memory = final_layer_norm(x, params["enc_norm"])

    # decoder stack
    y = tgt_emb
    for lp in params["dec_layers"]:
        y = decoder_layer(y, memory, lp, nhead, tgt_bias, mem_bias)
    y = final_layer_norm(y, params["dec_norm"])

    # fc_out: tm >= M (capped) so the (d_model, vocab) weight streams exactly once
    M = B * T
    logits = pallas_linear(y.reshape(M, d_model), params["fc_w"], params["fc_b"],
                           out_dtype=jnp.float32,
                           tm=min(1024, _round_up(M, 8)))
    if logits.shape[1] != vocab:
        logits = logits[:, :vocab]
    return logits.reshape(B, T, vocab)


# ----------------------------- deterministic init --------------------------

def init_params(key, vocab_size, d_model, nhead, num_enc, num_dec, dff):
    keys = iter(jax.random.split(key, 1024))
    dh = d_model // nhead
    scale = 1.0 / math.sqrt(dh)

    def uni(shape, a=0.1):
        return jax.random.uniform(next(keys), shape, jnp.float32, -a, a)

    def nrm(shape):
        return jax.random.normal(next(keys), shape, jnp.float32) * 0.02

    def bf(x):
        return x.astype(jnp.bfloat16)

    def self_attn_p():
        in_w = nrm((d_model, 3 * d_model))
        in_b = jnp.zeros((3 * d_model,), jnp.float32)
        in_w = in_w.at[:, :d_model].multiply(scale)      # fold 1/sqrt(Dh) into Q proj
        return dict(in_w=bf(in_w), in_b=in_b,
                    out_w=bf(nrm((d_model, d_model))),
                    out_b=jnp.zeros((d_model,), jnp.float32))

    def cross_attn_p():
        in_w = nrm((d_model, 3 * d_model))
        in_b = jnp.zeros((3 * d_model,), jnp.float32)
        return dict(q_w=bf(in_w[:, :d_model] * scale), q_b=in_b[:d_model] * scale,
                    kv_w=bf(in_w[:, d_model:]), kv_b=in_b[d_model:],
                    out_w=bf(nrm((d_model, d_model))),
                    out_b=jnp.zeros((d_model,), jnp.float32))

    def norm_p():
        return dict(g=jnp.ones((d_model,), jnp.float32),
                    b=jnp.zeros((d_model,), jnp.float32))

    def ffn_p():
        return dict(w1=bf(nrm((d_model, dff))), b1=jnp.zeros((dff,), jnp.float32),
                    w2=bf(nrm((dff, d_model))), b2=jnp.zeros((d_model,), jnp.float32))

    enc_layers = [dict(self_attn=self_attn_p(), ffn=ffn_p(),
                       norm1=norm_p(), norm2=norm_p()) for _ in range(num_enc)]
    dec_layers = [dict(self_attn=self_attn_p(), cross_attn=cross_attn_p(), ffn=ffn_p(),
                       norm1=norm_p(), norm2=norm_p(), norm3=norm_p())
                  for _ in range(num_dec)]

    # fc_out stored as weight.T, vocab dim pre-padded ONCE to a 128-multiple
    vp = _round_up(vocab_size, 128)
    fc_w = uni((d_model, vocab_size))                   # init_weights: uniform(-0.1, 0.1)
    fc_b = jnp.zeros((vocab_size,), jnp.float32)        # fc_out.bias.zero_()
    if vp != vocab_size:
        fc_w = jnp.pad(fc_w, ((0, 0), (0, vp - vocab_size)))
        fc_b = jnp.pad(fc_b, (0, vp - vocab_size))

    return dict(
        d_model=d_model, nhead=nhead, vocab_size=vocab_size,
        embedding=bf(uni((vocab_size, d_model))),       # uniform(-0.1, 0.1)
        fc_w=bf(fc_w), fc_b=fc_b,
        enc_layers=enc_layers, dec_layers=dec_layers,
        enc_norm=norm_p(), dec_norm=norm_p(),
    )


# ----------------------------- demo ----------------------------------------

if __name__ == "__main__":
    VOCAB = 128
    D_MODEL = 64      # small-shape stand-ins for the d_model=512 default
    NHEAD = 4
    N_ENC = 2
    N_DEC = 2
    DFF = 128
    B, S, T = 2, 8, 8
    PAD = 0

    root = jax.random.PRNGKey(0)
    kp, ks, kt = jax.random.split(root, 3)
    params = init_params(kp, VOCAB, D_MODEL, NHEAD, N_ENC, N_DEC, DFF)

    src = jax.random.randint(ks, (B, S), 1, VOCAB, dtype=jnp.int32)
    tgt = jax.random.randint(kt, (B, T), 1, VOCAB, dtype=jnp.int32)
    # exercise the key-padding masks
    src = src.at[:, -1].set(PAD)
    tgt = tgt.at[:, -1].set(PAD)

    logits = code_transformer_forward(params, src, tgt, PAD)
    jax.block_until_ready(logits)
    assert logits.shape == (B, T, VOCAB)
    assert bool(jnp.all(jnp.isfinite(logits)))
    print("KERNEL_OK")
</pallas_src>

<mosaic_0001>
module attributes {stable_mosaic.version = 11 : i64} {
  func.func @_linear_kernel(%arg0: i32, %arg1: i32, %arg2: i32, %arg3: memref<16x64xbf16, #tpu.memory_space<vmem>>, %arg4: memref<64x192xbf16, #tpu.memory_space<vmem>>, %arg5: memref<1x192xf32, #tpu.memory_space<vmem>>, %arg6: memref<16x192xbf16, #tpu.memory_space<vmem>>, %arg7: memref<16x192xf32, #tpu.memory_space<vmem>>) attributes {dimension_semantics = [#tpu.dimension_semantics<parallel>, #tpu.dimension_semantics<parallel>, #tpu.dimension_semantics<arbitrary>], iteration_bounds = array<i64: 1, 1, 1>, scalar_prefetch = 0 : i64, scratch_operands = 1 : i64, tpu.core_type = #tpu.core_type<tc>, window_params = [{transform_indices = @transform_0, window_bounds = array<i64: 16, 64>}, {transform_indices = @transform_1, window_bounds = array<i64: 64, 192>}, {transform_indices = @transform_2, window_bounds = array<i64: 1, 192>}, {transform_indices = @transform_3, window_bounds = array<i64: 16, 192>}]} {
    %c0_i32 = arith.constant 0 : i32
    %0 = arith.cmpi eq, %arg2, %c0_i32 : i32
    %1 = arith.extui %0 : i1 to i32
    %c0_i32_0 = arith.constant 0 : i32
    %2 = arith.cmpi ne, %1, %c0_i32_0 : i32
    scf.if %2 {
      %cst_10 = arith.constant 0.000000e+00 : f32
      %12 = vector.broadcast %cst_10 : f32 to vector<16x192xf32>
      %c0_11 = arith.constant 0 : index
      %c0_12 = arith.constant 0 : index
      %13 = vector.load %arg7[%c0_11, %c0_12] : memref<16x192xf32, #tpu.memory_space<vmem>>, vector<16x192xf32>
      tpu.vector_store %arg7[%c0_11, %c0_12], %12 {strides = array<i32>} : memref<16x192xf32, #tpu.memory_space<vmem>>, vector<16x192xf32>,
    } else {
    }
    %c0 = arith.constant 0 : index
    %c0_1 = arith.constant 0 : index
    %3 = vector.load %arg7[%c0, %c0_1] : memref<16x192xf32, #tpu.memory_space<vmem>>, vector<16x192xf32>
    %c0_2 = arith.constant 0 : index
    %c0_3 = arith.constant 0 : index
    %4 = vector.load %arg3[%c0_2, %c0_3] : memref<16x64xbf16, #tpu.memory_space<vmem>>, vector<16x64xbf16>
    %c0_4 = arith.constant 0 : index
    %c0_5 = arith.constant 0 : index
    %5 = vector.load %arg4[%c0_4, %c0_5] : memref<64x192xbf16, #tpu.memory_space<vmem>>, vector<64x192xbf16>
    %cst = arith.constant dense<0.000000e+00> : vector<16x192xf32>
    %6 = tpu.matmul %4, %5, %cst {dimension_numbers = #tpu.dot_dimension_numbers<[1], [0], [0], [1], [0, 0, 1, 1], [], []>} : vector<16x64xbf16>, vector<64x192xbf16>, vector<16x192xf32> -> vector<16x192xf32>
    %7 = arith.addf %3, %6 : vector<16x192xf32>
    %c0_6 = arith.constant 0 : index
    %c0_7 = arith.constant 0 : index
    %8 = vector.load %arg7[%c0_6, %c0_7] : memref<16x192xf32, #tpu.memory_space<vmem>>, vector<16x192xf32>
    tpu.vector_store %arg7[%c0_6, %c0_7], %7 {strides = array<i32>} : memref<16x192xf32, #tpu.memory_space<vmem>>, vector<16x192xf32>,
    %c0_i32_8 = arith.constant 0 : i32
    %9 = arith.cmpi eq, %arg2, %c0_i32_8 : i32
    %10 = arith.extui %9 : i1 to i32
    %c0_i32_9 = arith.constant 0 : i32
    %11 = arith.cmpi ne, %10, %c0_i32_9 : i32
    scf.if %11 {
      %c0_10 = arith.constant 0 : index
      %c0_11 = arith.constant 0 : index
      %12 = vector.load %arg7[%c0_10, %c0_11] : memref<16x192xf32, #tpu.memory_space<vmem>>, vector<16x192xf32>
      %c0_12 = arith.constant 0 : index
      %c0_13 = arith.constant 0 : index
      %13 = vector.load %arg5[%c0_12, %c0_13] : memref<1x192xf32, #tpu.memory_space<vmem>>, vector<1x192xf32>
      %14 = vector.broadcast %13 : vector<1x192xf32> to vector<16x192xf32>
      %15 = arith.addf %12, %14 : vector<16x192xf32>
      %16 = arith.truncf %15 : vector<16x192xf32> to vector<16x192xbf16>
      %c0_14 = arith.constant 0 : index
      %c0_15 = arith.constant 0 : index
      %17 = vector.load %arg6[%c0_14, %c0_15] : memref<16x192xbf16, #tpu.memory_space<vmem>>, vector<16x192xbf16>
      tpu.vector_store %arg6[%c0_14, %c0_15], %16 {strides = array<i32>} : memref<16x192xbf16, #tpu.memory_space<vmem>>, vector<16x192xbf16>,
    } else {
    }
    return
  }
  func.func @transform_0(%arg0: i32, %arg1: i32, %arg2: i32) -> (i32, i32) {
    %c0_i32 = arith.constant 0 : i32
    return %arg0, %arg2 : i32, i32
  }
  func.func @transform_1(%arg0: i32, %arg1: i32, %arg2: i32) -> (i32, i32) {
    %c0_i32 = arith.constant 0 : i32
    return %arg2, %arg1 : i32, i32
  }
  func.func @transform_2(%arg0: i32, %arg1: i32, %arg2: i32) -> (i32, i32) {
    %c0_i32 = arith.constant 0 : i32
    %c0_i32_0 = arith.constant 0 : i32
    return %c0_i32, %arg1 : i32, i32
  }
  func.func @transform_3(%arg0: i32, %arg1: i32, %arg2: i32) -> (i32, i32) {
    %c0_i32 = arith.constant 0 : i32
    return %arg0, %arg1 : i32, i32
  }
}

</mosaic_0001>

<llo_original>
// kernel: tpu_custom_call.1
$region0: #{tpu_custom_call.1}
  #allocation0 [shape = 'u32[]', space=smem, size = 0x4, offset = 0x4, fixed_abs, tag = 'smem constant byte address 0x4 - core index']
  #allocation1 [shape = 'u32[72,128]{1,0:T(1,128)}', space=vmem, size = 0x9000, scoped, tag = 'internal scratch']
  #allocation2 [shape = 'f32[16,192]{1,0:T(8,128)}', space=vmem, size = 0x4000, scoped, tag = 'scratch operand']
  %s0 = inlined_call_operand.hbm [shape: bf16[16,64], index: 0, kind: input, shape index: {}]
  %s1 = inlined_call_operand.hbm [shape: bf16[64,192], index: 1, kind: input, shape index: {}]
  %s2 = inlined_call_operand.hbm [shape: f32[1,192], index: 2, kind: input, shape index: {}]
  %s3 = inlined_call_operand.hbm [shape: bf16[16,192], index: 3, kind: output, shape index: {}]
  %s4 = sld [smem:[#allocation0]]
  $region42: #{tpu_custom_call.1} parent=0
    _
  %s6 = ssub.s32 1, %s4
  %s7 = scalar_select 0, %s6, %s4
  $region1: #{tpu_custom_call.1} parent=0
    #allocation3 [shape = 'u8[4096]{0}', space=vmem, size = 0x1000, scoped, tag = 'input window, operand 0, single buffered']
    #allocation4 [shape = 's32[1]{0}', space=sflag, size = 0x4, scoped, tag = 'scoped memory for tpu_custom_call.1']
    #allocation5 [shape = 's32[1]{0}', space=sflag, size = 0x4, scoped, tag = 'scoped memory for tpu_custom_call.1']
    #allocation6 [shape = 'u8[32768]{0}', space=vmem, size = 0x8000, scoped, tag = 'input window, operand 1, single buffered']
    #allocation7 [shape = 's32[1]{0}', space=sflag, size = 0x4, scoped, tag = 'scoped memory for tpu_custom_call.1']
    #allocation8 [shape = 'u8[1024]{0}', space=vmem, size = 0x400, scoped, tag = 'input window, operand 2, single buffered']
    #allocation9 [shape = 'u8[8192]{0}', space=vmem, size = 0x2000, scoped, tag = 'output window, operand 0, single buffered']
    %8 = vsyncpa [#allocation4], 0
    %9 = vsyncpa [#allocation7], 0
    %10 = vsyncpa [#allocation5], 0
    // Predicated region
    $region2: #{tpu_custom_call.1} parent=1 // pred_check
      _
    $region3: #{tpu_custom_call.1} parent=1 // pred_check_branch
      %12 = sbr.rel (0) target = $region5
    $region4: #{tpu_custom_call.1} parent=1 // pred_region
      %14 = vsyncadd [#allocation4], 0
      %s15 = sshll.u32 %s0, 4
      %s16 = int_to_ptr.hbm [resolvable:$true] %s15
      %s17 = sshll.u32 [#allocation3], 4
      %s18 = int_to_ptr.vmem [resolvable:$true] %s17
      %23 = dma.hbm_to_vmem [thread:$0]  %s16, 128, %s18, [#allocation4], 64, 64, 4
    $region5: #{tpu_custom_call.1} parent=1 // pred_fallthru
      _
    // Predicated region
    $region6: #{tpu_custom_call.1} parent=1 // pred_check
      _
    $region7: #{tpu_custom_call.1} parent=1 // pred_check_branch
      %25 = sbr.rel (0) target = $region9
    $region8: #{tpu_custom_call.1} parent=1 // pred_region
      %27 = vsyncadd [#allocation7], 0
      %s28 = sshll.u32 %s1, 4
      %s29 = int_to_ptr.hbm [resolvable:$true] %s28
      %s30 = sshll.u32 [#allocation6], 4
      %s31 = int_to_ptr.vmem [resolvable:$true] %s30
      %36 = dma.hbm_to_vmem [thread:$0]  %s29, 1024, %s31, [#allocation7], 128, 128, 8
    $region9: #{tpu_custom_call.1} parent=1 // pred_fallthru
      _
    // Predicated region
    $region10: #{tpu_custom_call.1} parent=1 // pred_check
      _
    $region11: #{tpu_custom_call.1} parent=1 // pred_check_branch
      %38 = sbr.rel (0) target = $region13
    $region12: #{tpu_custom_call.1} parent=1 // pred_region
      %40 = vsyncadd [#allocation7], 0
      %s42 = sshll.u32 %s2, 4
      %s43 = int_to_ptr.hbm [resolvable:$true] %s42
      %s44 = sshll.u32 [#allocation8], 4
      %s45 = int_to_ptr.vmem [resolvable:$true] %s44
      %47 = dma.hbm_to_vmem [thread:$0]  %s43, 32, %s45, [#allocation7]
    $region13: #{tpu_custom_call.1} parent=1 // pred_fallthru
      _
    // Predicated region
    $region14: #{tpu_custom_call.1} parent=1 // pred_check
      _
    $region15: #{tpu_custom_call.1} parent=1 // pred_check_branch
      %49 = sbr.rel (0) target = $region17
    $region16: #{tpu_custom_call.1} parent=1 // pred_region
      %51 = dma.done [#allocation4], 128
    $region17: #{tpu_custom_call.1} parent=1 // pred_fallthru
      _
    // Predicated region
    $region18: #{tpu_custom_call.1} parent=1 // pred_check
      _
    $region19: #{tpu_custom_call.1} parent=1 // pred_check_branch
      %53 = sbr.rel (0) target = $region21
    $region20: #{tpu_custom_call.1} parent=1 // pred_region
      %55 = dma.done [#allocation7], 1024
    $region21: #{tpu_custom_call.1} parent=1 // pred_fallthru
      _
    // Predicated region
    $region22: #{tpu_custom_call.1} parent=1 // pred_check
      _
    $region23: #{tpu_custom_call.1} parent=1 // pred_check_branch
      %57 = sbr.rel (0) target = $region25
    $region24: #{tpu_custom_call.1} parent=1 // pred_region
      %59 = dma.done [#allocation7], 32
    $region25: #{tpu_custom_call.1} parent=1 // pred_fallthru
      _
    %p61 = scmp.eq.s32.totalorder 0, 0
    // Predicated region
    $region26: #{tpu_custom_call.1} parent=1 // pred_check
      %p62 = pneg %p61
    $region27: #{tpu_custom_call.1} parent=1 // pred_check_branch
      %64 = sbr.rel (%p62) target = $region29
    $region28: #{tpu_custom_call.1} parent=1 // pred_region
      %65 = vst [vmem:[#allocation2] sm:$0xff] 0.0
      %vm66 = vcmask 523264
      %67 = vst.msk [vmem:[#allocation2 + $0x8] sm:$0xff] %vm66, 0.0
      %68 = vst [vmem:[#allocation2 + $0x10] sm:$0xff] 0.0
      %69 = vst.msk [vmem:[#allocation2 + $0x18] sm:$0xff] %vm66, 0.0
    $region29: #{tpu_custom_call.1} parent=1 // pred_fallthru
      _
    %v70 = vld [vmem:[#allocation2] sm:$0xff]
    %v71 = vld [vmem:[#allocation2 + $0x8] sm:$0xff]
    %v72 = vld [vmem:[#allocation2 + $0x10] sm:$0xff]
    %v73 = vld [vmem:[#allocation2 + $0x18] sm:$0xff]
    %v74 = vld [vmem:[#allocation3] sm:$0xf]
    %v75 = vld [vmem:[#allocation3 + $0x4] sm:$0xf]
    %v76 = vld [vmem:[#allocation6] sm:$0xff]
    %v77 = vld [vmem:[#allocation6 + $0x8] sm:$0xff]
    %v78 = vld [vmem:[#allocation6 + $0x10] sm:$0xff]
    %v79 = vld [vmem:[#allocation6 + $0x18] sm:$0xff]
    %v80 = vld [vmem:[#allocation6 + $0x20] sm:$0xff]
    %v81 = vld [vmem:[#allocation6 + $0x28] sm:$0xff]
    %v82 = vld [vmem:[#allocation6 + $0x30] sm:$0xff]
    %v83 = vld [vmem:[#allocation6 + $0x38] sm:$0xff]
    %v86 = vunpack.c.l.b16 %v74
    %v87 = vunpack.c.l.b16 %v75
    %v88 = vpack.c.b16 %v87, %v86
    %v97 = vunpack.c.l.b16 %v76
    %v98 = vunpack.c.h.b16 %v76
    %v99 = vunpack.c.l.b16 %v77
    %v100 = vunpack.c.h.b16 %v77
    %v101 = vunpack.c.l.b16 %v78
    %v102 = vunpack.c.h.b16 %v78
    %v103 = vunpack.c.l.b16 %v79
    %v104 = vunpack.c.h.b16 %v79
    %v105 = vunpack.c.l.b16 %v80
    %v106 = vunpack.c.h.b16 %v80
    %v107 = vunpack.c.l.b16 %v81
    %v108 = vunpack.c.h.b16 %v81
    %v109 = vunpack.c.l.b16 %v82
    %v110 = vunpack.c.h.b16 %v82
    %v111 = vunpack.c.l.b16 %v83
    %v112 = vunpack.c.h.b16 %v83
    %v113 = vpack.c.b16 %v99, %v97
    %v114 = vpack.c.b16 %v100, %v98
    %v115 = vpack.c.b16 %v103, %v101
    %v116 = vpack.c.b16 %v104, %v102
    %v117 = vpack.c.b16 %v107, %v105
    %v118 = vpack.c.b16 %v108, %v106
    %v119 = vpack.c.b16 %v111, %v109
    %v120 = vpack.c.b16 %v112, %v110
    %vm129 = vcmask 523264
    %v131 = vsel %vm129, %v88, 0
    %133 = vmatpush.bf16.msra.mxu0 0
    %134 = vmatpush.bf16.msra.mxu0 0
    %135 = vmatpush.bf16.msra.mxu0 0
    %136 = vmatpush.bf16.msra.mxu0 0
    %137 = vmatpush.bf16.msra.mxu0 %v119
    %138 = vmatpush.bf16.msra.mxu0 %v117
    %139 = vmatpush.bf16.msra.mxu0 %v115
    %140 = vmatpush.bf16.msra.mxu0 %v113
    %141 = vmatmul.bf16.gmra.mxu0 %v131
    %v142 = vpop.f32.mrf.mxu0
    %v143 = vadd.f32 0.0, %v142
    %v144 = vpop.f32.mrf.mxu0
    %v145 = vadd.f32 0.0, %v144
    %146 = vdwg.mxu0
    %147 = vmatpush.bf16.msra.mxu0 0
    %148 = vmatpush.bf16.msra.mxu0 0
    %149 = vmatpush.bf16.msra.mxu0 0
    %150 = vmatpush.bf16.msra.mxu0 0
    %151 = vmatpush.bf16.msra.mxu0 %v120
    %152 = vmatpush.bf16.msra.mxu0 %v118
    %153 = vmatpush.bf16.msra.mxu0 %v116
    %154 = vmatpush.bf16.msra.mxu0 %v114
    %155 = vmatmul.bf16.gmra.mxu0 %v131
    %v156 = vpop.f32.mrf.mxu0
    %v157 = vadd.f32 0.0, %v156
    %v158 = vpop.f32.mrf.mxu0
    %v159 = vadd.f32 0.0, %v158
    %160 = vdwg.mxu0
    %v161 = vadd.f32 %v70, %v143
    %v162 = vadd.f32 %v71, %v157
    %v163 = vadd.f32 %v72, %v145
    %v164 = vadd.f32 %v73, %v159
    %165 = vst [vmem:[#allocation2] sm:$0xff] %v161
    %166 = vst.msk [vmem:[#allocation2 + $0x8] sm:$0xff] %vm129, %v162
    %167 = vst [vmem:[#allocation2 + $0x10] sm:$0xff] %v163
    %168 = vst.msk [vmem:[#allocation2 + $0x18] sm:$0xff] %vm129, %v164
    // Predicated region
    $region30: #{tpu_custom_call.1} parent=1 // pred_check
      %p169 = pneg %p61
    $region31: #{tpu_custom_call.1} parent=1 // pred_check_branch
      %171 = sbr.rel (%p169) target = $region33
    $region32: #{tpu_custom_call.1} parent=1 // pred_region
      %v172 = vld [vmem:[#allocation2] sm:$0xff]
      %v173 = vld [vmem:[#allocation2 + $0x8] sm:$0xff]
      %v174 = vld [vmem:[#allocation2 + $0x10] sm:$0xff]
      %v175 = vld [vmem:[#allocation2 + $0x18] sm:$0xff]
      %v176 = vld [vmem:[#allocation8] sm:$0x3]
      %v178 = vperm.slane %v176, 0
      %v179 = vperm.slane %v176, 1
      %v182 = vadd.f32 %v172, %v178
      %v183 = vadd.f32 %v173, %v179
      %v184 = vadd.f32 %v174, %v178
      %v185 = vadd.f32 %v175, %v179
      %v186 = vpack.c.bf16 %v183, %v182
      %v187 = vpack.c.bf16 %v185, %v184
      %vm188 = vcmask 1043456
      %vm189 = vcmask 523268
      %vm190 = vmor %vm189, %vm188
      %191 = vst.msk [vmem:[#allocation9] sm:$0xff] %vm190, %v186
      %192 = vst.msk [vmem:[#allocation9 + $0x8] sm:$0xff] %vm190, %v187
    $region33: #{tpu_custom_call.1} parent=1 // pred_fallthru
      _
    // Predicated region
    $region34: #{tpu_custom_call.1} parent=1 // pred_check
      _
    $region35: #{tpu_custom_call.1} parent=1 // pred_check_branch
      %194 = sbr.rel (0) target = $region37
    $region36: #{tpu_custom_call.1} parent=1 // pred_region
      %196 = vsyncadd [#allocation5], 0
      %s197 = sshll.u32 [#allocation9], 4
      %s198 = int_to_ptr.vmem [resolvable:$true] %s197
      %s199 = sshll.u32 %s3, 4
      %s200 = int_to_ptr.hbm [resolvable:$true] %s199
      %205 = dma.vmem_to_hbm [thread:$0]  %s198, 256, %s200, [#allocation5], 128, 128, 8
    $region37: #{tpu_custom_call.1} parent=1 // pred_fallthru
      _
    // Predicated region
    $region38: #{tpu_custom_call.1} parent=1 // pred_check
      _
    $region39: #{tpu_custom_call.1} parent=1 // pred_check_branch
      %207 = sbr.rel (0) target = $region41
    $region40: #{tpu_custom_call.1} parent=1 // pred_region
      %209 = dma.done [#allocation5], 256
    $region41: #{tpu_custom_call.1} parent=1 // pred_fallthru
      _
    %210 = vsyncpa [#allocation4], 1
    %211 = vsyncpa [#allocation7], 1
    %212 = vsyncpa [#allocation5], 1

</llo_original>
